<compile_context>
chip_gen: v5e
topology: v5e:2x2
jax: 0.10.0
libtpu: 0.0.40
codegen_flags: <defaults>
</compile_context>

<pallas_src>
import jax
import jax.numpy as jnp
from jax.experimental import pallas as pl
from jax.experimental.pallas import tpu as pltpu


def _round_up(n, m):
    return ((n + m - 1) // m) * m


def _mlp_kernel(x_ref, w1_ref, b1_ref, w2_ref, b2_ref, o_ref):
    # fc1: hidden = relu(x @ W1 + b1).  bf16 MXU operands, f32 accumulation.
    x = x_ref[...].astype(jnp.bfloat16)
    h = jnp.dot(x, w1_ref[...], preferred_element_type=jnp.float32)
    h = jnp.maximum(h + b1_ref[...], 0.0)
    # fc2: out = hidden @ W2 + b2 (bias add in f32, store in output dtype).
    out = jnp.dot(h.astype(jnp.bfloat16), w2_ref[...],
                  preferred_element_type=jnp.float32)
    o_ref[...] = (out + b2_ref[...]).astype(o_ref.dtype)


def _pick_batch_tile(B, d_in, x_itemsize, *, target_steps=8, min_tile=128,
                     max_tile=1024, x_vmem_budget=16 * 1024 * 1024):
    """Batch tile: multiple of 8 sublanes; aims for >= target_steps grid steps
    at mid/large B (so v7x's 2 TCs each get several steps and the DMA pipeline
    overlaps), capped at max_tile and by a VMEM budget for the double-buffered
    x tile (relevant only at very large d_in)."""
    if B <= min_tile:
        tb = _round_up(B, 8)
    else:
        tb = _round_up(pl.cdiv(B, target_steps), 8)
        tb = max(min_tile, min(tb, max_tile))
    cap = (x_vmem_budget // (2 * max(1, d_in * x_itemsize))) // 8 * 8
    return max(8, min(tb, max(cap, 8)))


def multi_class_classifier(x, w1, b1, w2, b2):
    """Forward of Linear(d_in, H) -> ReLU -> Linear(H, C).

    x : (B, d_in)  f32 or bf16
    w1: (d_in, H)  ideally already bf16 (weights are constants; cast once)
    b1: (H,) or (1, H)
    w2: (H, C)     ideally already bf16
    b2: (C,) or (1, C)
    Returns (B, C) in x.dtype.
    """
    B, d_in = x.shape
    hidden = w1.shape[1]
    C = w2.shape[1]

    # Fallback cast (no-op if the caller pre-cast the params to bf16 upstream).
    if w1.dtype != jnp.bfloat16:
        w1 = w1.astype(jnp.bfloat16)
    if w2.dtype != jnp.bfloat16:
        w2 = w2.astype(jnp.bfloat16)
    b1 = b1.reshape(1, hidden).astype(jnp.float32)
    b2 = b2.reshape(1, C).astype(jnp.float32)

    tb = _pick_batch_tile(B, d_in, x.dtype.itemsize)
    grid = (pl.cdiv(B, tb),)  # ragged last block: OOB rows masked on write

    flops = 2 * B * (d_in * hidden + hidden * C)
    bytes_accessed = (B * d_in * x.dtype.itemsize          # x read
                      + d_in * hidden * 2 + hidden * C * 2  # bf16 weights
                      + (hidden + C) * 4                     # f32 biases
                      + B * C * x.dtype.itemsize)            # output write

    out = pl.pallas_call(
        _mlp_kernel,
        out_shape=jax.ShapeDtypeStruct((B, C), x.dtype),
        grid=grid,
        in_specs=[
            pl.BlockSpec((tb, d_in), lambda i: (i, 0)),       # x: batch tiled
            pl.BlockSpec((d_in, hidden), lambda i: (0, 0)),   # w1: VMEM resident
            pl.BlockSpec((1, hidden), lambda i: (0, 0)),      # b1: resident
            pl.BlockSpec((hidden, C), lambda i: (0, 0)),      # w2: resident
            pl.BlockSpec((1, C), lambda i: (0, 0)),           # b2: resident
        ],
        out_specs=pl.BlockSpec((tb, C), lambda i: (i, 0)),    # full class dim
        compiler_params=pltpu.CompilerParams(
            dimension_semantics=("parallel",),
            vmem_limit_bytes=32 * 1024 * 1024,
        ),
        cost_estimate=pl.CostEstimate(
            flops=flops, transcendentals=0, bytes_accessed=bytes_accessed),
    )(x, w1, b1, w2, b2)
    return out


def init_params(key, num_CKs, num_classes, hidden=64):
    """Deterministic synthetic init (PyTorch-style uniform fan-in bounds), f32."""
    d_in = 16 * num_CKs * num_classes
    k1, k2, k3, k4 = jax.random.split(key, 4)
    bound1 = 1.0 / jnp.sqrt(d_in)
    bound2 = 1.0 / jnp.sqrt(hidden)
    w1 = jax.random.uniform(k1, (d_in, hidden), jnp.float32, -bound1, bound1)
    b1 = jax.random.uniform(k2, (1, hidden), jnp.float32, -bound1, bound1)
    w2 = jax.random.uniform(k3, (hidden, num_classes), jnp.float32, -bound2, bound2)
    b2 = jax.random.uniform(k4, (1, num_classes), jnp.float32, -bound2, bound2)
    return w1, b1, w2, b2


if __name__ == "__main__":
    # Small config consistent with the module: num_CKs=2, num_classes=4
    #   -> d_in = 16 * 2 * 4 = 128, hidden = 64, C = 4.
    num_CKs = 2
    num_classes = 4
    d_in = 16 * num_CKs * num_classes  # 128

    key = jax.random.PRNGKey(0)
    kx, kp, kx2 = jax.random.split(key, 3)
    w1, b1, w2, b2 = init_params(kp, num_CKs, num_classes)

    # Pre-cast weights to bf16 ONCE at parameter-creation time (per review);
    # biases stay f32.
    w1_k = w1.astype(jnp.bfloat16)
    w2_k = w2.astype(jnp.bfloat16)

    def ref_fn(xv):  # f32 reference of the PyTorch module forward
        return jnp.maximum(xv @ w1 + b1, 0.0) @ w2 + b2

    # Spec-sized batch (B=8): single grid step, no padding anywhere.
    x = jax.random.normal(kx, (8, d_in), jnp.float32)
    out = jax.block_until_ready(multi_class_classifier(x, w1_k, b1, w2_k, b2))
    assert out.shape == (8, num_classes)
    assert jnp.allclose(out, ref_fn(x), atol=3e-2, rtol=3e-2), "mismatch (B=8)"

    # Ragged multi-step batch (B=300, tb=128 -> 3 grid steps, masked last block).
    x2 = jax.random.normal(kx2, (300, d_in), jnp.float32)
    out2 = jax.block_until_ready(multi_class_classifier(x2, w1_k, b1, w2_k, b2))
    assert out2.shape == (300, num_classes)
    assert jnp.allclose(out2, ref_fn(x2), atol=3e-2, rtol=3e-2), "mismatch (B=300)"

    print("KERNEL_OK")
</pallas_src>

<mosaic_0001>
module attributes {stable_mosaic.version = 11 : i64} {
  func.func @_mlp_kernel(%arg0: i32, %arg1: memref<8x128xf32, #tpu.memory_space<vmem>>, %arg2: memref<128x64xbf16, #tpu.memory_space<vmem>>, %arg3: memref<1x64xf32, #tpu.memory_space<vmem>>, %arg4: memref<64x4xbf16, #tpu.memory_space<vmem>>, %arg5: memref<1x4xf32, #tpu.memory_space<vmem>>, %arg6: memref<8x4xf32, #tpu.memory_space<vmem>>) attributes {dimension_semantics = [#tpu.dimension_semantics<parallel>], iteration_bounds = array<i64: 1>, scalar_prefetch = 0 : i64, scratch_operands = 0 : i64, tpu.core_type = #tpu.core_type<tc>, window_params = [{transform_indices = @transform_0, window_bounds = array<i64: 8, 128>}, {pipeline_mode = #tpu.pipeline_mode<synchronous>, transform_indices = @transform_1, window_bounds = array<i64: 128, 64>}, {pipeline_mode = #tpu.pipeline_mode<synchronous>, transform_indices = @transform_2, window_bounds = array<i64: 1, 64>}, {pipeline_mode = #tpu.pipeline_mode<synchronous>, transform_indices = @transform_3, window_bounds = array<i64: 64, 4>}, {pipeline_mode = #tpu.pipeline_mode<synchronous>, transform_indices = @transform_4, window_bounds = array<i64: 1, 4>}, {transform_indices = @transform_5, window_bounds = array<i64: 8, 4>}]} {
    %c0 = arith.constant 0 : index
    %c0_0 = arith.constant 0 : index
    %0 = vector.load %arg1[%c0, %c0_0] : memref<8x128xf32, #tpu.memory_space<vmem>>, vector<8x128xf32>
    %1 = arith.truncf %0 : vector<8x128xf32> to vector<8x128xbf16>
    %c0_1 = arith.constant 0 : index
    %c0_2 = arith.constant 0 : index
    %2 = vector.load %arg2[%c0_1, %c0_2] : memref<128x64xbf16, #tpu.memory_space<vmem>>, vector<128x64xbf16>
    %cst = arith.constant dense<0.000000e+00> : vector<8x64xf32>
    %3 = tpu.matmul %1, %2, %cst {dimension_numbers = #tpu.dot_dimension_numbers<[1], [0], [0], [1], [0, 0, 1, 1], [], []>} : vector<8x128xbf16>, vector<128x64xbf16>, vector<8x64xf32> -> vector<8x64xf32>
    %c0_3 = arith.constant 0 : index
    %c0_4 = arith.constant 0 : index
    %4 = vector.load %arg3[%c0_3, %c0_4] : memref<1x64xf32, #tpu.memory_space<vmem>>, vector<1x64xf32>
    %5 = vector.broadcast %4 : vector<1x64xf32> to vector<8x64xf32>
    %6 = arith.addf %3, %5 : vector<8x64xf32>
    %cst_5 = arith.constant 0.000000e+00 : f32
    %7 = vector.broadcast %cst_5 : f32 to vector<8x64xf32>
    %8 = arith.maximumf %6, %7 : vector<8x64xf32>
    %9 = arith.truncf %8 : vector<8x64xf32> to vector<8x64xbf16>
    %c0_6 = arith.constant 0 : index
    %c0_7 = arith.constant 0 : index
    %10 = vector.load %arg4[%c0_6, %c0_7] : memref<64x4xbf16, #tpu.memory_space<vmem>>, vector<64x4xbf16>
    %cst_8 = arith.constant dense<0.000000e+00> : vector<8x4xf32>
    %11 = tpu.matmul %9, %10, %cst_8 {dimension_numbers = #tpu.dot_dimension_numbers<[1], [0], [0], [1], [0, 0, 1, 1], [], []>} : vector<8x64xbf16>, vector<64x4xbf16>, vector<8x4xf32> -> vector<8x4xf32>
    %c0_9 = arith.constant 0 : index
    %c0_10 = arith.constant 0 : index
    %12 = vector.load %arg5[%c0_9, %c0_10] : memref<1x4xf32, #tpu.memory_space<vmem>>, vector<1x4xf32>
    %13 = vector.broadcast %12 : vector<1x4xf32> to vector<8x4xf32>
    %14 = arith.addf %11, %13 : vector<8x4xf32>
    %c0_11 = arith.constant 0 : index
    %c0_12 = arith.constant 0 : index
    %15 = vector.load %arg6[%c0_11, %c0_12] : memref<8x4xf32, #tpu.memory_space<vmem>>, vector<8x4xf32>
    tpu.vector_store %arg6[%c0_11, %c0_12], %14 {strides = array<i32>} : memref<8x4xf32, #tpu.memory_space<vmem>>, vector<8x4xf32>,
    return
  }
  func.func @transform_0(%arg0: i32) -> (i32, i32) {
    %c0_i32 = arith.constant 0 : i32
    %c0_i32_0 = arith.constant 0 : i32
    return %arg0, %c0_i32 : i32, i32
  }
  func.func @transform_1(%arg0: i32) -> (i32, i32) {
    %c0_i32 = arith.constant 0 : i32
    %c0_i32_0 = arith.constant 0 : i32
    %c0_i32_1 = arith.constant 0 : i32
    return %c0_i32, %c0_i32_0 : i32, i32
  }
  func.func @transform_2(%arg0: i32) -> (i32, i32) {
    %c0_i32 = arith.constant 0 : i32
    %c0_i32_0 = arith.constant 0 : i32
    %c0_i32_1 = arith.constant 0 : i32
    return %c0_i32, %c0_i32_0 : i32, i32
  }
  func.func @transform_3(%arg0: i32) -> (i32, i32) {
    %c0_i32 = arith.constant 0 : i32
    %c0_i32_0 = arith.constant 0 : i32
    %c0_i32_1 = arith.constant 0 : i32
    return %c0_i32, %c0_i32_0 : i32, i32
  }
  func.func @transform_4(%arg0: i32) -> (i32, i32) {
    %c0_i32 = arith.constant 0 : i32
    %c0_i32_0 = arith.constant 0 : i32
    %c0_i32_1 = arith.constant 0 : i32
    return %c0_i32, %c0_i32_0 : i32, i32
  }
  func.func @transform_5(%arg0: i32) -> (i32, i32) {
    %c0_i32 = arith.constant 0 : i32
    %c0_i32_0 = arith.constant 0 : i32
    return %arg0, %c0_i32 : i32, i32
  }
}

</mosaic_0001>

<llo_original>
// kernel: tpu_custom_call.1
$region0: #{tpu_custom_call.1}
  #allocation0 [shape = 'u32[]', space=smem, size = 0x4, offset = 0x4, fixed_abs, tag = 'smem constant byte address 0x4 - core index']
  #allocation1 [shape = 'u32[72,128]{1,0:T(1,128)}', space=vmem, size = 0x9000, scoped, tag = 'internal scratch']
  %s0 = inlined_call_operand.vmem [shape: f32[8,128], index: 0, kind: input, shape index: {}]
  %s1 = inlined_call_operand.vmem [shape: bf16[128,64], index: 1, kind: input, shape index: {}]
  %s2 = inlined_call_operand.vmem [shape: f32[1,64], index: 2, kind: input, shape index: {}]
  %s3 = inlined_call_operand.vmem [shape: bf16[64,4], index: 3, kind: input, shape index: {}]
  %s4 = inlined_call_operand.vmem [shape: f32[1,4], index: 4, kind: input, shape index: {}]
  %s5 = inlined_call_operand.vmem [shape: f32[8,4], index: 5, kind: output, shape index: {}]
  %s6 = sld [smem:[#allocation0]]
  $region30: #{tpu_custom_call.1} parent=0
    _
  %s8 = ssub.s32 1, %s6
  %s9 = scalar_select 0, %s8, %s6
  // Predicated region
  $region2: #{tpu_custom_call.1} parent=0 // pred_check
    _
  $region3: #{tpu_custom_call.1} parent=0 // pred_check_branch
    %11 = sbr.rel (0) target = $region5
  $region4: #{tpu_custom_call.1} parent=0 // pred_region
    _
  $region5: #{tpu_custom_call.1} parent=0 // pred_fallthru
    _
  // Predicated region
  $region6: #{tpu_custom_call.1} parent=0 // pred_check
    _
  $region7: #{tpu_custom_call.1} parent=0 // pred_check_branch
    %13 = sbr.rel (0) target = $region9
  $region8: #{tpu_custom_call.1} parent=0 // pred_region
    _
  $region9: #{tpu_custom_call.1} parent=0 // pred_fallthru
    _
  // Predicated region
  $region10: #{tpu_custom_call.1} parent=0 // pred_check
    _
  $region11: #{tpu_custom_call.1} parent=0 // pred_check_branch
    %15 = sbr.rel (0) target = $region13
  $region12: #{tpu_custom_call.1} parent=0 // pred_region
    _
  $region13: #{tpu_custom_call.1} parent=0 // pred_fallthru
    _
  // Predicated region
  $region14: #{tpu_custom_call.1} parent=0 // pred_check
    _
  $region15: #{tpu_custom_call.1} parent=0 // pred_check_branch
    %17 = sbr.rel (0) target = $region17
  $region16: #{tpu_custom_call.1} parent=0 // pred_region
    _
  $region17: #{tpu_custom_call.1} parent=0 // pred_fallthru
    _
  // Predicated region
  $region18: #{tpu_custom_call.1} parent=0 // pred_check
    _
  $region19: #{tpu_custom_call.1} parent=0 // pred_check_branch
    %19 = sbr.rel (0) target = $region21
  $region20: #{tpu_custom_call.1} parent=0 // pred_region
    _
  $region21: #{tpu_custom_call.1} parent=0 // pred_fallthru
    _
  %v21 = vld [vmem:[%s0] sm:$0xff]
  %v22 = vpack.c.bf16 %v21, %v21
  %v23 = vld [vmem:[%s1] sm:$0xf]
  %v24 = vld [vmem:[%s1 + $0x4] sm:$0xf]
  %v25 = vld [vmem:[%s1 + $0x8] sm:$0xf]
  %v26 = vld [vmem:[%s1 + $0xc] sm:$0xf]
  %v27 = vld [vmem:[%s1 + $0x10] sm:$0xf]
  %v28 = vld [vmem:[%s1 + $0x14] sm:$0xf]
  %v29 = vld [vmem:[%s1 + $0x18] sm:$0xf]
  %v30 = vld [vmem:[%s1 + $0x1c] sm:$0xf]
  %v31 = vld [vmem:[%s1 + $0x20] sm:$0xf]
  %v32 = vld [vmem:[%s1 + $0x24] sm:$0xf]
  %v33 = vld [vmem:[%s1 + $0x28] sm:$0xf]
  %v34 = vld [vmem:[%s1 + $0x2c] sm:$0xf]
  %v35 = vld [vmem:[%s1 + $0x30] sm:$0xf]
  %v36 = vld [vmem:[%s1 + $0x34] sm:$0xf]
  %v37 = vld [vmem:[%s1 + $0x38] sm:$0xf]
  %v38 = vld [vmem:[%s1 + $0x3c] sm:$0xf]
  %v39 = vld [vmem:[%s2] sm:$0x1]
  %v41 = vperm.slane %v39, 0
  %v59 = vunpack.c.l.b16 %v23
  %v60 = vunpack.c.l.b16 %v24
  %v61 = vunpack.c.l.b16 %v25
  %v62 = vunpack.c.l.b16 %v26
  %v63 = vunpack.c.l.b16 %v27
  %v64 = vunpack.c.l.b16 %v28
  %v65 = vunpack.c.l.b16 %v29
  %v66 = vunpack.c.l.b16 %v30
  %v67 = vunpack.c.l.b16 %v31
  %v68 = vunpack.c.l.b16 %v32
  %v69 = vunpack.c.l.b16 %v33
  %v70 = vunpack.c.l.b16 %v34
  %v71 = vunpack.c.l.b16 %v35
  %v72 = vunpack.c.l.b16 %v36
  %v73 = vunpack.c.l.b16 %v37
  %v74 = vunpack.c.l.b16 %v38
  %v75 = vpack.c.b16 %v60, %v59
  %v76 = vpack.c.b16 %v62, %v61
  %v77 = vpack.c.b16 %v64, %v63
  %v78 = vpack.c.b16 %v66, %v65
  %v79 = vpack.c.b16 %v68, %v67
  %v80 = vpack.c.b16 %v70, %v69
  %v81 = vpack.c.b16 %v72, %v71
  %v82 = vpack.c.b16 %v74, %v73
  %91 = vmatpush.bf16.msra.mxu0 %v82
  %92 = vmatpush.bf16.msra.mxu0 %v81
  %93 = vmatpush.bf16.msra.mxu0 %v80
  %94 = vmatpush.bf16.msra.mxu0 %v79
  %95 = vmatpush.bf16.msra.mxu0 %v78
  %96 = vmatpush.bf16.msra.mxu0 %v77
  %97 = vmatpush.bf16.msra.mxu0 %v76
  %98 = vmatpush.bf16.msra.mxu0 %v75
  %99 = vmatmul.bf16.gmra.mxu0 %v22
  %v100 = vpop.f32.mrf.mxu0
  %v101 = vadd.f32 %v41, %v100
  %v102 = vpop.f32.mrf.mxu0
  %103 = vdwg.mxu0
  %v104 = vmax.f32 %v101, 0.0
  %v105 = vpack.c.bf16 %v104, %v104
  %v106 = vld [vmem:[%s3] sm:$0xf]
  %v107 = vld [vmem:[%s3 + $0x4] sm:$0xf]
  %v108 = vld [vmem:[%s3 + $0x8] sm:$0xf]
  %v109 = vld [vmem:[%s3 + $0xc] sm:$0xf]
  %v110 = vld [vmem:[%s3 + $0x10] sm:$0xf]
  %v111 = vld [vmem:[%s3 + $0x14] sm:$0xf]
  %v112 = vld [vmem:[%s3 + $0x18] sm:$0xf]
  %v113 = vld [vmem:[%s3 + $0x1c] sm:$0xf]
  %v114 = vld [vmem:[%s4] sm:$0x1]
  %v116 = vperm.slane %v114, 0
  %v126 = vunpack.c.l.b16 %v106
  %v127 = vunpack.c.l.b16 %v107
  %v128 = vunpack.c.l.b16 %v108
  %v129 = vunpack.c.l.b16 %v109
  %v130 = vunpack.c.l.b16 %v110
  %v131 = vunpack.c.l.b16 %v111
  %v132 = vunpack.c.l.b16 %v112
  %v133 = vunpack.c.l.b16 %v113
  %v134 = vpack.c.b16 %v127, %v126
  %v135 = vpack.c.b16 %v129, %v128
  %v136 = vpack.c.b16 %v131, %v130
  %v137 = vpack.c.b16 %v133, %v132
  %vm142 = vcmask 523264
  %v144 = vsel %vm142, %v105, 0
  %146 = vmatpush.bf16.msra.mxu0 0
  %147 = vmatpush.bf16.msra.mxu0 0
  %148 = vmatpush.bf16.msra.mxu0 0
  %149 = vmatpush.bf16.msra.mxu0 0
  %150 = vmatpush.bf16.msra.mxu0 %v137
  %151 = vmatpush.bf16.msra.mxu0 %v136
  %152 = vmatpush.bf16.msra.mxu0 %v135
  %153 = vmatpush.bf16.msra.mxu0 %v134
  %154 = vmatmul.bf16.gmra.mxu0 %v144
  %v155 = vpop.f32.mrf.mxu0
  %v156 = vadd.f32 %v116, %v155
  %v157 = vpop.f32.mrf.mxu0
  %158 = vdwg.mxu0
  %vm159 = vcmask 31744
  %160 = vst.msk [vmem:[%s5] sm:$0xff] %vm159, %v156
  // Predicated region
  $region22: #{tpu_custom_call.1} parent=0 // pred_check
    _
  $region23: #{tpu_custom_call.1} parent=0 // pred_check_branch
    %162 = sbr.rel (0) target = $region25
  $region24: #{tpu_custom_call.1} parent=0 // pred_region
    _
  $region25: #{tpu_custom_call.1} parent=0 // pred_fallthru
    _
  // Predicated region
  $region26: #{tpu_custom_call.1} parent=0 // pred_check
    _
  $region27: #{tpu_custom_call.1} parent=0 // pred_check_branch
    %164 = sbr.rel (0) target = $region29
  $region28: #{tpu_custom_call.1} parent=0 // pred_region
    _
  $region29: #{tpu_custom_call.1} parent=0 // pred_fallthru
    _

</llo_original>
